<compile_context>
chip_gen: v7x
topology: tpu7x:2x2x1
jax: 0.10.0
libtpu: 0.0.40
codegen_flags: <defaults>
</compile_context>

<pallas_src>
import math

import jax
import jax.numpy as jnp
from jax.experimental import pallas as pl
from jax.experimental.pallas import tpu as pltpu

# Material / geometry constants (match the PyTorch module)
N_AMORPHOUS_IMAG = 0.3
N_CRYSTALLINE_IMAG = 0.9
N_AMORPHOUS_REAL = 5.5       # unused by forward output (phase_shift dropped)
N_CRYSTALLINE_REAL = 6.9     # unused by forward output
WAVELENGTH = 1.55e-6
THICKNESS = 1e-7

_LANES = 128  # TPU vreg lane width


def _pcm_scale_kernel(t_ref, x_ref, o_ref):
    """Scale one lane-dense tile of the signal by the precomputed transmission.

    t_ref : SMEM (1,) float32       -- transmission scalar (computed once outside)
    x_ref : VMEM (tile_rows, 128)   -- flattened optical-signal tile
    o_ref : VMEM (tile_rows, 128)   -- modulated-signal tile
    """
    t = t_ref[0].astype(o_ref.dtype)        # scalar cast; keeps VPU in native dtype
    o_ref[...] = x_ref[...] * t


def _round_up(x: int, m: int) -> int:
    return ((x + m - 1) // m) * m


def _default_max_tile_rows() -> int:
    """Per-generation block size: ~4 MiB f32 blocks on v6e/v7x, ~2 MiB on v5e."""
    try:
        kind = jax.devices()[0].device_kind.lower()
    except Exception:
        return 4096
    if ("v6" in kind) or ("v7" in kind) or ("7x" in kind) or ("trillium" in kind):
        return 8192
    return 4096           # conservative for v5e's 16 MiB default scoped VMEM


def phase_change_cell_forward(optical_signal: jax.Array,
                              pcm_state: jax.Array,
                              *,
                              max_tile_rows: int | None = None,
                              min_pallas_elems: int = 64 * 1024,
                              force_pallas: bool = False) -> jax.Array:
    """optical_signal: [batch, n_wavelengths]; pcm_state: (1,) f32 (or scalar)."""
    orig_shape = optical_signal.shape
    dtype = optical_signal.dtype
    n = optical_signal.size

    # --- Scalar PCM physics: computed ONCE in the wrapper (not per tile). ---
    state = jnp.clip(jnp.ravel(pcm_state)[0].astype(jnp.float32), 0.0, 1.0)
    n_imag = (1.0 - state) * N_AMORPHOUS_IMAG + state * N_CRYSTALLINE_IMAG
    transmission = jnp.exp(
        jnp.float32(-4.0 * math.pi / WAVELENGTH * THICKNESS) * n_imag
    ).reshape(1)
    # TODO(synk): phase_shift (uses n_real) is computed in the PyTorch forward
    # but never applied to the output, so it is intentionally not materialized.

    # --- Small-problem fast path: a standalone kernel is pure overhead. ---
    if n < min_pallas_elems and not force_pallas:
        return (optical_signal * transmission[0].astype(dtype)).astype(dtype)

    # --- Lane-dense layout: flatten and view as [rows, 128]. ---
    itemsize = jnp.dtype(dtype).itemsize
    sublane = 8 * max(1, 4 // itemsize)          # 8 for f32, 16 for bf16, ...
    rows = pl.cdiv(n, _LANES)                    # minimal row count
    padded_n = rows * _LANES                     # pad ONLY to the 128-lane boundary

    if max_tile_rows is None:
        max_tile_rows = _default_max_tile_rows()
    max_tile_rows = max(sublane, (max_tile_rows // sublane) * sublane)

    if rows <= sublane:
        # Single block covering the whole (tiny) array: block == full array dims.
        tile_rows = rows
    else:
        # >= 2 grid steps whenever possible (engages both TCs on v7x and
        # double-buffering everywhere); keep the block sublane-aligned so the
        # ragged last block stays legal.
        tile_rows = min(max_tile_rows, _round_up(pl.cdiv(rows, 2), sublane))

    grid = (pl.cdiv(rows, tile_rows),)           # ragged last block handled by Pallas

    flat = jnp.ravel(optical_signal)
    if padded_n != n:
        flat = jnp.pad(flat, (0, padded_n - n))  # only when n isn't lane-aligned
    x2d = flat.reshape(rows, _LANES)

    out2d = pl.pallas_call(
        _pcm_scale_kernel,
        out_shape=jax.ShapeDtypeStruct((rows, _LANES), dtype),
        grid=grid,
        in_specs=[
            # transmission scalar: whole (1,) array resident in SMEM
            pl.BlockSpec(memory_space=pltpu.MemorySpace.SMEM),
            # signal: lane-dense tiles, double-buffered by Pallas
            pl.BlockSpec((tile_rows, _LANES), lambda i: (i, 0)),
        ],
        out_specs=pl.BlockSpec((tile_rows, _LANES), lambda i: (i, 0)),
        compiler_params=pltpu.CompilerParams(
            dimension_semantics=("parallel",),   # megacore sharding on v7x
        ),
    )(transmission, x2d)

    out_flat = out2d.reshape(-1)
    if padded_n != n:
        out_flat = out_flat[:n]                  # slice only if we padded
    return out_flat.reshape(orig_shape)


def _reference(optical_signal, pcm_state):
    state = jnp.clip(pcm_state, 0.0, 1.0)
    n_imag = (1.0 - state) * N_AMORPHOUS_IMAG + state * N_CRYSTALLINE_IMAG
    transmission = jnp.exp(-4.0 * math.pi * n_imag / WAVELENGTH * THICKNESS)
    return optical_signal * transmission


if __name__ == "__main__":
    k1, k2 = jax.random.split(jax.random.PRNGKey(0))

    # Deterministic parameter init: initial_state=0.0 as in the module default.
    pcm_state = jnp.array([0.0], dtype=jnp.float32)

    # Module-sized input: [batch, n_wavelengths]
    batch, n_wavelengths = 2, 16
    optical_signal = jax.random.normal(k1, (batch, n_wavelengths), dtype=jnp.float32)
    ref = _reference(optical_signal, pcm_state)

    # 1) Default path: tiny input auto-falls back to a fused XLA multiply.
    out = jax.block_until_ready(phase_change_cell_forward(optical_signal, pcm_state))
    assert out.shape == (batch, n_wavelengths)
    assert jnp.allclose(out, ref, rtol=1e-6, atol=1e-6)

    # 2) Force the Pallas kernel at the module shape (single full-array block).
    out_k = jax.block_until_ready(
        phase_change_cell_forward(optical_signal, pcm_state, force_pallas=True))
    assert jnp.allclose(out_k, ref, rtol=1e-6, atol=1e-6)

    # 3) Odd-shaped input exercising the padding-free tiling, the ragged last
    #    block and a >=2-step grid (still tiny and fast).
    x_med = jax.random.normal(k2, (37, 300), dtype=jnp.float32)
    pcm_state2 = jnp.array([0.4], dtype=jnp.float32)
    out_med = jax.block_until_ready(
        phase_change_cell_forward(x_med, pcm_state2, force_pallas=True))
    assert jnp.allclose(out_med, _reference(x_med, pcm_state2), rtol=1e-6, atol=1e-6)

    print("KERNEL_OK")
</pallas_src>

<mosaic_0001>
module attributes {stable_mosaic.version = 11 : i64} {
  func.func @_pcm_scale_kernel(%arg0: i32, %arg1: memref<1xf32, #tpu.memory_space<smem>>, %arg2: memref<1x128xf32, #tpu.memory_space<vmem>>, %arg3: memref<1x128xf32, #tpu.memory_space<vmem>>) attributes {dimension_semantics = [#tpu.dimension_semantics<parallel>], iteration_bounds = array<i64: 1>, scalar_prefetch = 0 : i64, scratch_operands = 0 : i64, tpu.core_type = #tpu.core_type<tc>, window_params = [{transform_indices = @transform_0, window_bounds = array<i64: 1>}, {transform_indices = @transform_1, window_bounds = array<i64: 1, 128>}, {transform_indices = @transform_2, window_bounds = array<i64: 1, 128>}]} {
    %c0 = arith.constant 0 : index
    %0 = memref.load %arg1[%c0] : memref<1xf32, #tpu.memory_space<smem>>
    %c0_0 = arith.constant 0 : index
    %c0_1 = arith.constant 0 : index
    %1 = vector.load %arg2[%c0_0, %c0_1] : memref<1x128xf32, #tpu.memory_space<vmem>>, vector<1x128xf32>
    %2 = vector.broadcast %0 : f32 to vector<1x128xf32>
    %3 = arith.mulf %1, %2 : vector<1x128xf32>
    %c0_2 = arith.constant 0 : index
    %c0_3 = arith.constant 0 : index
    %4 = vector.load %arg3[%c0_2, %c0_3] : memref<1x128xf32, #tpu.memory_space<vmem>>, vector<1x128xf32>
    tpu.vector_store %arg3[%c0_2, %c0_3], %3 {strides = array<i32>} : memref<1x128xf32, #tpu.memory_space<vmem>>, vector<1x128xf32>,
    return
  }
  func.func @transform_0(%arg0: i32) -> i32 {
    %c0_i32 = arith.constant 0 : i32
    %c0_i32_0 = arith.constant 0 : i32
    return %c0_i32 : i32
  }
  func.func @transform_1(%arg0: i32) -> (i32, i32) {
    %c0_i32 = arith.constant 0 : i32
    %c0_i32_0 = arith.constant 0 : i32
    return %arg0, %c0_i32 : i32, i32
  }
  func.func @transform_2(%arg0: i32) -> (i32, i32) {
    %c0_i32 = arith.constant 0 : i32
    %c0_i32_0 = arith.constant 0 : i32
    return %arg0, %c0_i32 : i32, i32
  }
}

</mosaic_0001>

<llo_original>
// kernel: tpu_custom_call.1
$region0: #{tpu_custom_call.1}
  #allocation0 [shape = 'u32[]', space=smem, size = 0x4, offset = 0x4, fixed_abs, tag = 'smem constant byte address 0x4 - core index']
  #allocation1 [shape = 'u32[144,128]{1,0:T(1,128)}', space=vmem, size = 0x12000, scoped, tag = 'internal scratch']
  #allocation2 [shape = 'f32[1]{0:T(128)S(6)}', space=smem, size = 0x200, scoped, tag = 'scoped memory for tpu_custom_call.1']
  %s0 = inlined_call_operand.<no memory space> [shape: f32[1], index: 0, kind: input, shape index: {}]
  %s1 = inlined_call_operand.vmem [shape: f32[1,128], index: 1, kind: input, shape index: {}]
  %s2 = inlined_call_operand.hbm [shape: f32[1,128], index: 2, kind: output, shape index: {}]
  %s3 = sld [smem:[#allocation0]]
  $region18: #{tpu_custom_call.1} parent=0
    _
  %s5 = ssub.s32 1, %s3
  %s6 = scalar_select 0, %s5, %s3
  %7 = sst [smem:[#allocation2]] %s0
  $region1: #{tpu_custom_call.1} parent=0
    #allocation3 [shape = 'u8[512]{0}', space=vmem, size = 0x400, scoped, tag = 'output window, operand 0, single buffered']
    #allocation4 [shape = 's32[1]{0}', space=sflag, size = 0x4, scoped, tag = 'scoped memory for tpu_custom_call.1']
    %8 = vsyncpa [#allocation4], 0
    // Predicated region
    $region2: #{tpu_custom_call.1} parent=1 // pred_check
      _
    $region3: #{tpu_custom_call.1} parent=1 // pred_check_branch
      %10 = sbr.rel (0) target = $region5
    $region4: #{tpu_custom_call.1} parent=1 // pred_region
      _
    $region5: #{tpu_custom_call.1} parent=1 // pred_fallthru
      _
    // Predicated region
    $region6: #{tpu_custom_call.1} parent=1 // pred_check
      _
    $region7: #{tpu_custom_call.1} parent=1 // pred_check_branch
      %12 = sbr.rel (0) target = $region9
    $region8: #{tpu_custom_call.1} parent=1 // pred_region
      _
    $region9: #{tpu_custom_call.1} parent=1 // pred_fallthru
      _
    %s13 = sld [smem:[#allocation2]]
    %v14 = vld [vmem:[%s1] sm:$0x1]
    %v15 = vstv %s13
    %v16 = vmul.f32 %v14, %v15
    %17 = vst [vmem:[#allocation3] sm:$0x1] %v16
    // Predicated region
    $region10: #{tpu_custom_call.1} parent=1 // pred_check
      _
    $region11: #{tpu_custom_call.1} parent=1 // pred_check_branch
      %19 = sbr.rel (0) target = $region13
    $region12: #{tpu_custom_call.1} parent=1 // pred_region
      %s21 = ssub.s32 16, 16
      %22 = vsyncadd [#allocation4], %s21
      %s24 = sshll.u32 [#allocation3], 4
      %s25 = int_to_ptr.vmem [resolvable:$true] %s24
      %27 = dma.vmem_to_hbm [thread:$0]  %s25, 16, %s2, [#allocation4]
    $region13: #{tpu_custom_call.1} parent=1 // pred_fallthru
      _
    // Predicated region
    $region14: #{tpu_custom_call.1} parent=1 // pred_check
      _
    $region15: #{tpu_custom_call.1} parent=1 // pred_check_branch
      %29 = sbr.rel (0) target = $region17
    $region16: #{tpu_custom_call.1} parent=1 // pred_region
      %30 = dma.done [#allocation4], 16
    $region17: #{tpu_custom_call.1} parent=1 // pred_fallthru
      _
    %31 = vsyncpa [#allocation4], 1

</llo_original>
